<compile_context>
chip_gen: v6e
topology: v6e:2x2x1
jax: 0.10.0
libtpu: 0.0.40
codegen_flags: <defaults>
</compile_context>

<pallas_src>
import jax
import jax.numpy as jnp
from jax import lax
from jax.experimental import pallas as pl
from jax.experimental.pallas import tpu as pltpu


def _int_pow(x, e: int):
    """x**e for a static non-negative integer e via repeated squaring (no jnp.power)."""
    if e == 0:
        return jnp.ones_like(x)
    acc = None
    base = x
    while e:
        if e & 1:
            acc = base if acc is None else acc * base
        e >>= 1
        if e:
            base = base * base
    return acc


# ----------------------------------------------------------------------------
# Fused kernel: squared pairwise distances (MXU) + Prim MST (H0 deaths) + pq loss
# ----------------------------------------------------------------------------
def _make_pqloss_kernel(p: int, q: int, n: int, unroll: bool):
    # Bits of the lane index packed into the low mantissa bits of the selection key.
    # Tie-breaking and the recovered death value are affected by <= 2^-(23-idx_bits)
    # relative error (negligible; ~2e-6 for n=16).
    idx_bits = max(1, (n - 1).bit_length())
    lo_mask = (1 << idx_bits) - 1
    hi_mask = ~lo_mask                      # Python int -> int32 literal inside the kernel
    coef = 0.5 ** q                         # fold d^p * (d/2)^q = 2^-q * d^(p+q)
    s = p + q

    def kernel(x_ref, loss_ref, d2_ref):
        # ---- Phase 1: squared pairwise distances, kept entirely in VMEM (no sqrt pass).
        # D is tiny (K=8) so the MXU is nowhere near the bottleneck; no D padding.
        x = x_ref[...].astype(jnp.float32)                       # (n, d)
        gram = lax.dot_general(                                  # MXU: X @ X^T, no transpose
            x, x,
            dimension_numbers=(((1,), (1,)), ((), ())),
            preferred_element_type=jnp.float32)                  # (n, n)
        sq = jnp.sum(x * x, axis=1, keepdims=True)               # (n, 1)
        d2 = jnp.maximum(sq + sq.T - 2.0 * gram, 0.0)            # clamp cancellation noise
        d2_ref[...] = d2

        # ---- Phase 2: Prim's MST on squared distances (single-linkage H0 deaths).
        # All loop state is carried in vregs; one XLU reduce + one dynamic d2 row load
        # per iteration on the serial chain.
        # TODO(synk): for n >~ 256, pack the Prim state sublane-dense ((8, ceil(n/8))
        # layout) to cut per-iteration VPU/XLU work up to ~8x; irrelevant for n <= 128.
        col = lax.broadcasted_iota(jnp.int32, (1, n), 1)
        # vertex 0 seeds the tree; in-tree lanes are poisoned with +inf (no mask buffer)
        mind0 = jnp.where(col == 0, jnp.inf, d2[0:1, :])
        keys0 = jnp.zeros((1, n), jnp.int32)

        def body(k, carry):
            mind, keys = carry                                   # vreg-resident carries
            # Single reduction on the loop-carried path: pack (value bits | lane index).
            # Non-negative f32 bit patterns are order-preserving as int32; +inf (in-tree)
            # lanes always lose to any finite lane.
            bits = lax.bitcast_convert_type(mind, jnp.int32)
            key = (bits & hi_mask) | col
            min_key = jnp.min(key)                               # new tree vertex + value bits
            j = min_key & lo_mask
            # Deposit the winning key for step k (register select, no VMEM traffic).
            keys = jnp.where(col == k, min_key, keys)
            # Fold vertex j into the tree; keep previously in-tree lanes at +inf.
            row_j = d2_ref[pl.ds(j, 1), :]                       # (1, n) dynamic row load
            mind = jnp.where((col == j) | jnp.isinf(mind), jnp.inf,
                             jnp.minimum(mind, row_j))
            return mind, keys

        if unroll:
            # Fully unrolled (straight-line code) for small n: no loop overhead, full
            # LLO scheduler visibility.
            _, keys = lax.fori_loop(0, n - 1, body, (mind0, keys0), unroll=True)
        else:
            _, keys = lax.fori_loop(0, n - 1, body, (mind0, keys0))

        # ---- Phase 3: vectorized death recovery + loss (one pass).
        #   sum_i (d_i - 0)^p * ((d_i + 0)/2)^q  =  2^-q * sum_i d_i^(p+q)
        d2_death = lax.bitcast_convert_type(keys & hi_mask, jnp.float32)  # squared deaths
        valid = col < (n - 1)
        if s % 2 == 0:
            powed = _int_pow(d2_death, s // 2)                   # even exponent: skip sqrt
        else:
            powed = _int_pow(jnp.sqrt(d2_death), s)
        total = jnp.sum(jnp.where(valid, coef * powed, 0.0))
        # Lane-dense, (8,128)-aligned output block -> unmasked stores.
        loss_ref[...] = jnp.full((1, 1, 128), total, jnp.float32)

    return kernel


def _vmem_capacity_bytes() -> int:
    """Generation-aware VMEM ceiling (v5e/v6e: 128 MiB, v7x: 64 MiB)."""
    try:
        return int(pltpu.get_tpu_info().vmem_capacity_bytes)
    except Exception:
        return 64 << 20          # conservative default = smallest current generation (v7x)


def pq_loss_h0_batched(xs, p: int, q: int):
    """PQ loss of the H0 (single-linkage MST) persistence diagram per point cloud.

    xs: (B, N, D) -> (B,) losses. One fused pallas_call; the (N, N) squared-distance
    matrix never leaves VMEM.
    """
    b, n, d = xs.shape
    dist_bytes = 4 * n * n
    in_bytes = 4 * n * d
    headroom = 8 << 20                       # Mosaic internal scratch + output + slack
    vmem_cap = _vmem_capacity_bytes()
    needed = dist_bytes + 2 * in_bytes + headroom   # input block is double-buffered
    if needed > vmem_cap:
        # TODO(synk): for very large N keep the distance matrix HBM-resident (pl.ANY) and
        # stream rows with pltpu.make_async_copy instead of a VMEM-resident scratch.
        raise ValueError(
            f"point cloud too large for the fused VMEM-resident kernel "
            f"(needs ~{needed >> 20} MiB VMEM, chip has {vmem_cap >> 20} MiB)")
    vmem_limit = int(min(max(needed, 16 << 20), vmem_cap))

    unroll = n <= 64                          # full unroll of the serial Prim loop if small
    kernel = _make_pqloss_kernel(p, q, n, unroll)

    out = pl.pallas_call(
        kernel,
        out_shape=jax.ShapeDtypeStruct((b, 1, 128), jnp.float32),
        grid=(b,),
        in_specs=[pl.BlockSpec((None, n, d), lambda i: (i, 0, 0))],
        out_specs=pl.BlockSpec((1, 1, 128), lambda i: (i, 0, 0)),
        scratch_shapes=[
            pltpu.VMEM((n, n), jnp.float32),  # squared pairwise distances (never hits HBM)
        ],
        compiler_params=pltpu.CompilerParams(
            dimension_semantics=("parallel",),   # v7x: both TensorCores take clouds
            vmem_limit_bytes=vmem_limit),
    )(xs)
    return out[:, 0, 0]


def pq_loss_h0_fused(x, p: int, q: int):
    """Single point cloud (N, D) -> scalar loss."""
    return pq_loss_h0_batched(x[None], p, q)[0]


# ----------------------------------------------------------------------------
# Module port
# ----------------------------------------------------------------------------
class PQLoss:
    """JAX/Pallas port of intrinsic.nn.loss.ph.PQLoss (forward only, no parameters)."""

    def __init__(self, p: int, q: int, maxdim: int = 1):
        self.left, self.right = p, q
        self.maxdim = maxdim
        # TODO(synk): H_k bars for k >= 1 (Vietoris-Rips boundary-matrix reduction) have no
        # clean Pallas equivalent; only H_0 (single-linkage MST) persistence is computed.
        # The essential H_0 bar (death = NaN) is zeroed by nan_to_num and contributes 0.

    def __call__(self, X):
        return pq_loss_h0_fused(X, self.left, self.right)


# ----------------------------------------------------------------------------
# Pure-JAX reference (for a sanity check in __main__)
# ----------------------------------------------------------------------------
def _pq_loss_h0_reference(x, p: int, q: int):
    x = x.astype(jnp.float32)
    n = x.shape[0]
    d2 = jnp.sum((x[:, None, :] - x[None, :, :]) ** 2, axis=-1)
    idx = jnp.arange(n)
    mind0 = jnp.where(idx == 0, jnp.inf, d2[0])

    def body(_, state):
        mind, acc = state
        j = jnp.argmin(mind)
        death = jnp.sqrt(mind[j])
        acc = acc + (death ** p) * ((0.5 * death) ** q)
        mind = jnp.where((idx == j) | jnp.isinf(mind), jnp.inf, jnp.minimum(mind, d2[j]))
        return mind, acc

    _, acc = jax.lax.fori_loop(0, n - 1, body, (mind0, jnp.zeros((), jnp.float32)))
    return acc


if __name__ == "__main__":
    N, D = 16, 8                      # small point cloud: 16 points in R^8
    X = jax.random.normal(jax.random.PRNGKey(0), (N, D), dtype=jnp.float32)

    loss_fn = PQLoss(p=2, q=1, maxdim=1)
    loss = loss_fn(X)
    jax.block_until_ready(loss)

    ref = _pq_loss_h0_reference(X, 2, 1)
    jax.block_until_ready(ref)
    got, want = float(loss), float(ref)
    if abs(got - want) > 1e-3 * max(abs(want), 1.0):
        raise AssertionError(f"PQLoss kernel mismatch: kernel={got} reference={want}")

    # Batched path: grid over clouds ("parallel" -> both v7x TensorCores busy).
    Xb = jax.random.normal(jax.random.PRNGKey(1), (2, N, D), dtype=jnp.float32)
    losses = pq_loss_h0_batched(Xb, 2, 1)
    jax.block_until_ready(losses)
    for i in range(Xb.shape[0]):
        want_i = float(_pq_loss_h0_reference(Xb[i], 2, 1))
        got_i = float(losses[i])
        if abs(got_i - want_i) > 1e-3 * max(abs(want_i), 1.0):
            raise AssertionError(
                f"PQLoss batched kernel mismatch at {i}: kernel={got_i} reference={want_i}")

    print("KERNEL_OK")
</pallas_src>

<mosaic_0001>
module attributes {stable_mosaic.version = 11 : i64} {
  func.func @kernel(%arg0: i32, %arg1: memref<1x16x8xf32, #tpu.memory_space<vmem>>, %arg2: memref<1x1x128xf32, #tpu.memory_space<vmem>>, %arg3: memref<16x16xf32, #tpu.memory_space<vmem>>) attributes {dimension_semantics = [#tpu.dimension_semantics<parallel>], iteration_bounds = array<i64: 1>, scalar_prefetch = 0 : i64, scratch_operands = 1 : i64, tpu.core_type = #tpu.core_type<tc>, window_params = [{transform_indices = @transform_0, window_bounds = array<i64: 1, 16, 8>}, {transform_indices = @transform_1, window_bounds = array<i64: 1, 1, 128>}]} {
    %c0 = arith.constant 0 : index
    %c0_0 = arith.constant 0 : index
    %c0_1 = arith.constant 0 : index
    %0 = vector.load %arg1[%c0, %c0_0, %c0_1] : memref<1x16x8xf32, #tpu.memory_space<vmem>>, vector<1x16x8xf32>
    %1 = vector.shape_cast %0 : vector<1x16x8xf32> to vector<16x8xf32>
    %cst = arith.constant dense<0.000000e+00> : vector<16x16xf32>
    %2 = tpu.matmul %1, %1, %cst {dimension_numbers = #tpu.dot_dimension_numbers<[1], [1], [0], [0], [0, 0, 1, 0], [], []>} : vector<16x8xf32>, vector<16x8xf32>, vector<16x16xf32> -> vector<16x16xf32>
    %3 = arith.mulf %1, %1 : vector<16x8xf32>
    %cst_2 = arith.constant dense<0.000000e+00> : vector<16xf32>
    %4 = vector.multi_reduction <add>, %3, %cst_2 [1] : vector<16x8xf32> to vector<16xf32>
    %5 = vector.shape_cast %4 : vector<16xf32> to vector<16x1xf32>
    %6 = tpu.transpose %5, [1, 0] : vector<16x1xf32> -> vector<1x16xf32>
    %7 = vector.broadcast %5 : vector<16x1xf32> to vector<16x16xf32>
    %8 = vector.broadcast %6 : vector<1x16xf32> to vector<16x16xf32>
    %9 = arith.addf %7, %8 : vector<16x16xf32>
    %cst_3 = arith.constant 2.000000e+00 : f32
    %10 = vector.broadcast %cst_3 : f32 to vector<16x16xf32>
    %11 = arith.mulf %10, %2 : vector<16x16xf32>
    %12 = arith.subf %9, %11 : vector<16x16xf32>
    %cst_4 = arith.constant 0.000000e+00 : f32
    %13 = vector.broadcast %cst_4 : f32 to vector<16x16xf32>
    %14 = arith.maximumf %12, %13 : vector<16x16xf32>
    %c0_5 = arith.constant 0 : index
    %c0_6 = arith.constant 0 : index
    %15 = vector.load %arg3[%c0_5, %c0_6] : memref<16x16xf32, #tpu.memory_space<vmem>>, vector<16x16xf32>
    tpu.vector_store %arg3[%c0_5, %c0_6], %14 {strides = array<i32>} : memref<16x16xf32, #tpu.memory_space<vmem>>, vector<16x16xf32>,
    %16 = tpu.iota {dimensions = array<i32: 1>} : vector<1x16xi32>
    %c0_i32 = arith.constant 0 : i32
    %17 = vector.broadcast %c0_i32 : i32 to vector<1x16xi32>
    %18 = arith.cmpi eq, %16, %17 : vector<1x16xi32>
    %19 = vector.extract_strided_slice %14 {offsets = [0, 0], sizes = [1, 16], strides = [1, 1]} : vector<16x16xf32> to vector<1x16xf32>
    %cst_7 = arith.constant 0x7F800000 : f32
    %20 = vector.broadcast %cst_7 : f32 to vector<1x16xf32>
    %21 = arith.select %18, %20, %19 : vector<1x16xi1>, vector<1x16xf32>
    %c0_i32_8 = arith.constant 0 : i32
    %22 = vector.broadcast %c0_i32_8 : i32 to vector<1x16xi32>
    %c0_i32_9 = arith.constant 0 : i32
    %23 = tpu.bitcast %21 : vector<1x16xf32> -> vector<1x16xi32>
    %c-16_i32 = arith.constant -16 : i32
    %24 = vector.broadcast %c-16_i32 : i32 to vector<1x16xi32>
    %25 = arith.andi %23, %24 : vector<1x16xi32>
    %26 = arith.ori %25, %16 : vector<1x16xi32>
    %27 = vector.shape_cast %26 : vector<1x16xi32> to vector<1x1x16xi32>
    %cst_10 = arith.constant dense<2147483647> : vector<1xi32>
    %28 = vector.multi_reduction <minsi>, %27, %cst_10 [1, 2] : vector<1x1x16xi32> to vector<1xi32>
    %29 = vector.shape_cast %28 : vector<1xi32> to vector<1x1x1xi32>
    %30 = vector.extract %29[0, 0, 0] : i32 from vector<1x1x1xi32>
    %c15_i32 = arith.constant 15 : i32
    %31 = arith.andi %30, %c15_i32 : i32
    %32 = vector.broadcast %c0_i32_9 : i32 to vector<1x16xi32>
    %33 = arith.cmpi eq, %16, %32 : vector<1x16xi32>
    %34 = vector.broadcast %30 : i32 to vector<1x16xi32>
    %35 = arith.select %33, %34, %22 : vector<1x16xi1>, vector<1x16xi32>
    %36 = arith.index_cast %31 : i32 to index
    %c0_11 = arith.constant 0 : index
    %37 = vector.load %arg3[%36, %c0_11] : memref<16x16xf32, #tpu.memory_space<vmem>>, vector<1x16xf32>
    %38 = vector.broadcast %31 : i32 to vector<1x16xi32>
    %39 = arith.cmpi eq, %16, %38 : vector<1x16xi32>
    %40 = math.absf %21 : vector<1x16xf32>
    %cst_12 = arith.constant 0x7F800000 : f32
    %41 = vector.broadcast %cst_12 : f32 to vector<1x16xf32>
    %42 = arith.cmpf oeq, %40, %41 : vector<1x16xf32>
    %43 = arith.ori %39, %42 : vector<1x16xi1>
    %44 = arith.minimumf %21, %37 : vector<1x16xf32>
    %cst_13 = arith.constant 0x7F800000 : f32
    %45 = vector.broadcast %cst_13 : f32 to vector<1x16xf32>
    %46 = arith.select %43, %45, %44 : vector<1x16xi1>, vector<1x16xf32>
    %c1_i32 = arith.constant 1 : i32
    %47 = tpu.bitcast %46 : vector<1x16xf32> -> vector<1x16xi32>
    %c-16_i32_14 = arith.constant -16 : i32
    %48 = vector.broadcast %c-16_i32_14 : i32 to vector<1x16xi32>
    %49 = arith.andi %47, %48 : vector<1x16xi32>
    %50 = arith.ori %49, %16 : vector<1x16xi32>
    %51 = vector.shape_cast %50 : vector<1x16xi32> to vector<1x1x16xi32>
    %cst_15 = arith.constant dense<2147483647> : vector<1xi32>
    %52 = vector.multi_reduction <minsi>, %51, %cst_15 [1, 2] : vector<1x1x16xi32> to vector<1xi32>
    %53 = vector.shape_cast %52 : vector<1xi32> to vector<1x1x1xi32>
    %54 = vector.extract %53[0, 0, 0] : i32 from vector<1x1x1xi32>
    %c15_i32_16 = arith.constant 15 : i32
    %55 = arith.andi %54, %c15_i32_16 : i32
    %56 = vector.broadcast %c1_i32 : i32 to vector<1x16xi32>
    %57 = arith.cmpi eq, %16, %56 : vector<1x16xi32>
    %58 = vector.broadcast %54 : i32 to vector<1x16xi32>
    %59 = arith.select %57, %58, %35 : vector<1x16xi1>, vector<1x16xi32>
    %60 = arith.index_cast %55 : i32 to index
    %c0_17 = arith.constant 0 : index
    %61 = vector.load %arg3[%60, %c0_17] : memref<16x16xf32, #tpu.memory_space<vmem>>, vector<1x16xf32>
    %62 = vector.broadcast %55 : i32 to vector<1x16xi32>
    %63 = arith.cmpi eq, %16, %62 : vector<1x16xi32>
    %64 = math.absf %46 : vector<1x16xf32>
    %cst_18 = arith.constant 0x7F800000 : f32
    %65 = vector.broadcast %cst_18 : f32 to vector<1x16xf32>
    %66 = arith.cmpf oeq, %64, %65 : vector<1x16xf32>
    %67 = arith.ori %63, %66 : vector<1x16xi1>
    %68 = arith.minimumf %46, %61 : vector<1x16xf32>
    %cst_19 = arith.constant 0x7F800000 : f32
    %69 = vector.broadcast %cst_19 : f32 to vector<1x16xf32>
    %70 = arith.select %67, %69, %68 : vector<1x16xi1>, vector<1x16xf32>
    %c2_i32 = arith.constant 2 : i32
    %71 = tpu.bitcast %70 : vector<1x16xf32> -> vector<1x16xi32>
    %c-16_i32_20 = arith.constant -16 : i32
    %72 = vector.broadcast %c-16_i32_20 : i32 to vector<1x16xi32>
    %73 = arith.andi %71, %72 : vector<1x16xi32>
    %74 = arith.ori %73, %16 : vector<1x16xi32>
    %75 = vector.shape_cast %74 : vector<1x16xi32> to vector<1x1x16xi32>
    %cst_21 = arith.constant dense<2147483647> : vector<1xi32>
    %76 = vector.multi_reduction <minsi>, %75, %cst_21 [1, 2] : vector<1x1x16xi32> to vector<1xi32>
    %77 = vector.shape_cast %76 : vector<1xi32> to vector<1x1x1xi32>
    %78 = vector.extract %77[0, 0, 0] : i32 from vector<1x1x1xi32>
    %c15_i32_22 = arith.constant 15 : i32
    %79 = arith.andi %78, %c15_i32_22 : i32
    %80 = vector.broadcast %c2_i32 : i32 to vector<1x16xi32>
    %81 = arith.cmpi eq, %16, %80 : vector<1x16xi32>
    %82 = vector.broadcast %78 : i32 to vector<1x16xi32>
    %83 = arith.select %81, %82, %59 : vector<1x16xi1>, vector<1x16xi32>
    %84 = arith.index_cast %79 : i32 to index
    %c0_23 = arith.constant 0 : index
    %85 = vector.load %arg3[%84, %c0_23] : memref<16x16xf32, #tpu.memory_space<vmem>>, vector<1x16xf32>
    %86 = vector.broadcast %79 : i32 to vector<1x16xi32>
    %87 = arith.cmpi eq, %16, %86 : vector<1x16xi32>
    %88 = math.absf %70 : vector<1x16xf32>
    %cst_24 = arith.constant 0x7F800000 : f32
    %89 = vector.broadcast %cst_24 : f32 to vector<1x16xf32>
    %90 = arith.cmpf oeq, %88, %89 : vector<1x16xf32>
    %91 = arith.ori %87, %90 : vector<1x16xi1>
    %92 = arith.minimumf %70, %85 : vector<1x16xf32>
    %cst_25 = arith.constant 0x7F800000 : f32
    %93 = vector.broadcast %cst_25 : f32 to vector<1x16xf32>
    %94 = arith.select %91, %93, %92 : vector<1x16xi1>, vector<1x16xf32>
    %c3_i32 = arith.constant 3 : i32
    %95 = tpu.bitcast %94 : vector<1x16xf32> -> vector<1x16xi32>
    %c-16_i32_26 = arith.constant -16 : i32
    %96 = vector.broadcast %c-16_i32_26 : i32 to vector<1x16xi32>
    %97 = arith.andi %95, %96 : vector<1x16xi32>
    %98 = arith.ori %97, %16 : vector<1x16xi32>
    %99 = vector.shape_cast %98 : vector<1x16xi32> to vector<1x1x16xi32>
    %cst_27 = arith.constant dense<2147483647> : vector<1xi32>
    %100 = vector.multi_reduction <minsi>, %99, %cst_27 [1, 2] : vector<1x1x16xi32> to vector<1xi32>
    %101 = vector.shape_cast %100 : vector<1xi32> to vector<1x1x1xi32>
    %102 = vector.extract %101[0, 0, 0] : i32 from vector<1x1x1xi32>
    %c15_i32_28 = arith.constant 15 : i32
    %103 = arith.andi %102, %c15_i32_28 : i32
    %104 = vector.broadcast %c3_i32 : i32 to vector<1x16xi32>
    %105 = arith.cmpi eq, %16, %104 : vector<1x16xi32>
    %106 = vector.broadcast %102 : i32 to vector<1x16xi32>
    %107 = arith.select %105, %106, %83 : vector<1x16xi1>, vector<1x16xi32>
    %108 = arith.index_cast %103 : i32 to index
    %c0_29 = arith.constant 0 : index
    %109 = vector.load %arg3[%108, %c0_29] : memref<16x16xf32, #tpu.memory_space<vmem>>, vector<1x16xf32>
    %110 = vector.broadcast %103 : i32 to vector<1x16xi32>
    %111 = arith.cmpi eq, %16, %110 : vector<1x16xi32>
    %112 = math.absf %94 : vector<1x16xf32>
    %cst_30 = arith.constant 0x7F800000 : f32
    %113 = vector.broadcast %cst_30 : f32 to vector<1x16xf32>
    %114 = arith.cmpf oeq, %112, %113 : vector<1x16xf32>
    %115 = arith.ori %111, %114 : vector<1x16xi1>
    %116 = arith.minimumf %94, %109 : vector<1x16xf32>
    %cst_31 = arith.constant 0x7F800000 : f32
    %117 = vector.broadcast %cst_31 : f32 to vector<1x16xf32>
    %118 = arith.select %115, %117, %116 : vector<1x16xi1>, vector<1x16xf32>
    %c4_i32 = arith.constant 4 : i32
    %119 = tpu.bitcast %118 : vector<1x16xf32> -> vector<1x16xi32>
    %c-16_i32_32 = arith.constant -16 : i32
    %120 = vector.broadcast %c-16_i32_32 : i32 to vector<1x16xi32>
    %121 = arith.andi %119, %120 : vector<1x16xi32>
    %122 = arith.ori %121, %16 : vector<1x16xi32>
    %123 = vector.shape_cast %122 : vector<1x16xi32> to vector<1x1x16xi32>
    %cst_33 = arith.constant dense<2147483647> : vector<1xi32>
    %124 = vector.multi_reduction <minsi>, %123, %cst_33 [1, 2] : vector<1x1x16xi32> to vector<1xi32>
    %125 = vector.shape_cast %124 : vector<1xi32> to vector<1x1x1xi32>
    %126 = vector.extract %125[0, 0, 0] : i32 from vector<1x1x1xi32>
    %c15_i32_34 = arith.constant 15 : i32
    %127 = arith.andi %126, %c15_i32_34 : i32
    %128 = vector.broadcast %c4_i32 : i32 to vector<1x16xi32>
    %129 = arith.cmpi eq, %16, %128 : vector<1x16xi32>
    %130 = vector.broadcast %126 : i32 to vector<1x16xi32>
    %131 = arith.select %129, %130, %107 : vector<1x16xi1>, vector<1x16xi32>
    %132 = arith.index_cast %127 : i32 to index
    %c0_35 = arith.constant 0 : index
    %133 = vector.load %arg3[%132, %c0_35] : memref<16x16xf32, #tpu.memory_space<vmem>>, vector<1x16xf32>
    %134 = vector.broadcast %127 : i32 to vector<1x16xi32>
    %135 = arith.cmpi eq, %16, %134 : vector<1x16xi32>
    %136 = math.absf %118 : vector<1x16xf32>
    %cst_36 = arith.constant 0x7F800000 : f32
    %137 = vector.broadcast %cst_36 : f32 to vector<1x16xf32>
    %138 = arith.cmpf oeq, %136, %137 : vector<1x16xf32>
    %139 = arith.ori %135, %138 : vector<1x16xi1>
    %140 = arith.minimumf %118, %133 : vector<1x16xf32>
    %cst_37 = arith.constant 0x7F800000 : f32
    %141 = vector.broadcast %cst_37 : f32 to vector<1x16xf32>
    %142 = arith.select %139, %141, %140 : vector<1x16xi1>, vector<1x16xf32>
    %c5_i32 = arith.constant 5 : i32
    %143 = tpu.bitcast %142 : vector<1x16xf32> -> vector<1x16xi32>
    %c-16_i32_38 = arith.constant -16 : i32
    %144 = vector.broadcast %c-16_i32_38 : i32 to vector<1x16xi32>
    %145 = arith.andi %143, %144 : vector<1x16xi32>
    %146 = arith.ori %145, %16 : vector<1x16xi32>
    %147 = vector.shape_cast %146 : vector<1x16xi32> to vector<1x1x16xi32>
    %cst_39 = arith.constant dense<2147483647> : vector<1xi32>
    %148 = vector.multi_reduction <minsi>, %147, %cst_39 [1, 2] : vector<1x1x16xi32> to vector<1xi32>
    %149 = vector.shape_cast %148 : vector<1xi32> to vector<1x1x1xi32>
    %150 = vector.extract %149[0, 0, 0] : i32 from vector<1x1x1xi32>
    %c15_i32_40 = arith.constant 15 : i32
    %151 = arith.andi %150, %c15_i32_40 : i32
    %152 = vector.broadcast %c5_i32 : i32 to vector<1x16xi32>
    %153 = arith.cmpi eq, %16, %152 : vector<1x16xi32>
    %154 = vector.broadcast %150 : i32 to vector<1x16xi32>
    %155 = arith.select %153, %154, %131 : vector<1x16xi1>, vector<1x16xi32>
    %156 = arith.index_cast %151 : i32 to index
    %c0_41 = arith.constant 0 : index
    %157 = vector.load %arg3[%156, %c0_41] : memref<16x16xf32, #tpu.memory_space<vmem>>, vector<1x16xf32>
    %158 = vector.broadcast %151 : i32 to vector<1x16xi32>
    %159 = arith.cmpi eq, %16, %158 : vector<1x16xi32>
    %160 = math.absf %142 : vector<1x16xf32>
    %cst_42 = arith.constant 0x7F800000 : f32
    %161 = vector.broadcast %cst_42 : f32 to vector<1x16xf32>
    %162 = arith.cmpf oeq, %160, %161 : vector<1x16xf32>
    %163 = arith.ori %159, %162 : vector<1x16xi1>
    %164 = arith.minimumf %142, %157 : vector<1x16xf32>
    %cst_43 = arith.constant 0x7F800000 : f32
    %165 = vector.broadcast %cst_43 : f32 to vector<1x16xf32>
    %166 = arith.select %163, %165, %164 : vector<1x16xi1>, vector<1x16xf32>
    %c6_i32 = arith.constant 6 : i32
    %167 = tpu.bitcast %166 : vector<1x16xf32> -> vector<1x16xi32>
    %c-16_i32_44 = arith.constant -16 : i32
    %168 = vector.broadcast %c-16_i32_44 : i32 to vector<1x16xi32>
    %169 = arith.andi %167, %168 : vector<1x16xi32>
    %170 = arith.ori %169, %16 : vector<1x16xi32>
    %171 = vector.shape_cast %170 : vector<1x16xi32> to vector<1x1x16xi32>
    %cst_45 = arith.constant dense<2147483647> : vector<1xi32>
    %172 = vector.multi_reduction <minsi>, %171, %cst_45 [1, 2] : vector<1x1x16xi32> to vector<1xi32>
    %173 = vector.shape_cast %172 : vector<1xi32> to vector<1x1x1xi32>
    %174 = vector.extract %173[0, 0, 0] : i32 from vector<1x1x1xi32>
    %c15_i32_46 = arith.constant 15 : i32
    %175 = arith.andi %174, %c15_i32_46 : i32
    %176 = vector.broadcast %c6_i32 : i32 to vector<1x16xi32>
    %177 = arith.cmpi eq, %16, %176 : vector<1x16xi32>
    %178 = vector.broadcast %174 : i32 to vector<1x16xi32>
    %179 = arith.select %177, %178, %155 : vector<1x16xi1>, vector<1x16xi32>
    %180 = arith.index_cast %175 : i32 to index
    %c0_47 = arith.constant 0 : index
    %181 = vector.load %arg3[%180, %c0_47] : memref<16x16xf32, #tpu.memory_space<vmem>>, vector<1x16xf32>
    %182 = vector.broadcast %175 : i32 to vector<1x16xi32>
    %183 = arith.cmpi eq, %16, %182 : vector<1x16xi32>
    %184 = math.absf %166 : vector<1x16xf32>
    %cst_48 = arith.constant 0x7F800000 : f32
    %185 = vector.broadcast %cst_48 : f32 to vector<1x16xf32>
    %186 = arith.cmpf oeq, %184, %185 : vector<1x16xf32>
    %187 = arith.ori %183, %186 : vector<1x16xi1>
    %188 = arith.minimumf %166, %181 : vector<1x16xf32>
    %cst_49 = arith.constant 0x7F800000 : f32
    %189 = vector.broadcast %cst_49 : f32 to vector<1x16xf32>
    %190 = arith.select %187, %189, %188 : vector<1x16xi1>, vector<1x16xf32>
    %c7_i32 = arith.constant 7 : i32
    %191 = tpu.bitcast %190 : vector<1x16xf32> -> vector<1x16xi32>
    %c-16_i32_50 = arith.constant -16 : i32
    %192 = vector.broadcast %c-16_i32_50 : i32 to vector<1x16xi32>
    %193 = arith.andi %191, %192 : vector<1x16xi32>
    %194 = arith.ori %193, %16 : vector<1x16xi32>
    %195 = vector.shape_cast %194 : vector<1x16xi32> to vector<1x1x16xi32>
    %cst_51 = arith.constant dense<2147483647> : vector<1xi32>
    %196 = vector.multi_reduction <minsi>, %195, %cst_51 [1, 2] : vector<1x1x16xi32> to vector<1xi32>
    %197 = vector.shape_cast %196 : vector<1xi32> to vector<1x1x1xi32>
    %198 = vector.extract %197[0, 0, 0] : i32 from vector<1x1x1xi32>
    %c15_i32_52 = arith.constant 15 : i32
    %199 = arith.andi %198, %c15_i32_52 : i32
    %200 = vector.broadcast %c7_i32 : i32 to vector<1x16xi32>
    %201 = arith.cmpi eq, %16, %200 : vector<1x16xi32>
    %202 = vector.broadcast %198 : i32 to vector<1x16xi32>
    %203 = arith.select %201, %202, %179 : vector<1x16xi1>, vector<1x16xi32>
    %204 = arith.index_cast %199 : i32 to index
    %c0_53 = arith.constant 0 : index
    %205 = vector.load %arg3[%204, %c0_53] : memref<16x16xf32, #tpu.memory_space<vmem>>, vector<1x16xf32>
    %206 = vector.broadcast %199 : i32 to vector<1x16xi32>
    %207 = arith.cmpi eq, %16, %206 : vector<1x16xi32>
    %208 = math.absf %190 : vector<1x16xf32>
    %cst_54 = arith.constant 0x7F800000 : f32
    %209 = vector.broadcast %cst_54 : f32 to vector<1x16xf32>
    %210 = arith.cmpf oeq, %208, %209 : vector<1x16xf32>
    %211 = arith.ori %207, %210 : vector<1x16xi1>
    %212 = arith.minimumf %190, %205 : vector<1x16xf32>
    %cst_55 = arith.constant 0x7F800000 : f32
    %213 = vector.broadcast %cst_55 : f32 to vector<1x16xf32>
    %214 = arith.select %211, %213, %212 : vector<1x16xi1>, vector<1x16xf32>
    %c8_i32 = arith.constant 8 : i32
    %215 = tpu.bitcast %214 : vector<1x16xf32> -> vector<1x16xi32>
    %c-16_i32_56 = arith.constant -16 : i32
    %216 = vector.broadcast %c-16_i32_56 : i32 to vector<1x16xi32>
    %217 = arith.andi %215, %216 : vector<1x16xi32>
    %218 = arith.ori %217, %16 : vector<1x16xi32>
    %219 = vector.shape_cast %218 : vector<1x16xi32> to vector<1x1x16xi32>
    %cst_57 = arith.constant dense<2147483647> : vector<1xi32>
    %220 = vector.multi_reduction <minsi>, %219, %cst_57 [1, 2] : vector<1x1x16xi32> to vector<1xi32>
    %221 = vector.shape_cast %220 : vector<1xi32> to vector<1x1x1xi32>
    %222 = vector.extract %221[0, 0, 0] : i32 from vector<1x1x1xi32>
    %c15_i32_58 = arith.constant 15 : i32
    %223 = arith.andi %222, %c15_i32_58 : i32
    %224 = vector.broadcast %c8_i32 : i32 to vector<1x16xi32>
    %225 = arith.cmpi eq, %16, %224 : vector<1x16xi32>
    %226 = vector.broadcast %222 : i32 to vector<1x16xi32>
    %227 = arith.select %225, %226, %203 : vector<1x16xi1>, vector<1x16xi32>
    %228 = arith.index_cast %223 : i32 to index
    %c0_59 = arith.constant 0 : index
    %229 = vector.load %arg3[%228, %c0_59] : memref<16x16xf32, #tpu.memory_space<vmem>>, vector<1x16xf32>
    %230 = vector.broadcast %223 : i32 to vector<1x16xi32>
    %231 = arith.cmpi eq, %16, %230 : vector<1x16xi32>
    %232 = math.absf %214 : vector<1x16xf32>
    %cst_60 = arith.constant 0x7F800000 : f32
    %233 = vector.broadcast %cst_60 : f32 to vector<1x16xf32>
    %234 = arith.cmpf oeq, %232, %233 : vector<1x16xf32>
    %235 = arith.ori %231, %234 : vector<1x16xi1>
    %236 = arith.minimumf %214, %229 : vector<1x16xf32>
    %cst_61 = arith.constant 0x7F800000 : f32
    %237 = vector.broadcast %cst_61 : f32 to vector<1x16xf32>
    %238 = arith.select %235, %237, %236 : vector<1x16xi1>, vector<1x16xf32>
    %c9_i32 = arith.constant 9 : i32
    %239 = tpu.bitcast %238 : vector<1x16xf32> -> vector<1x16xi32>
    %c-16_i32_62 = arith.constant -16 : i32
    %240 = vector.broadcast %c-16_i32_62 : i32 to vector<1x16xi32>
    %241 = arith.andi %239, %240 : vector<1x16xi32>
    %242 = arith.ori %241, %16 : vector<1x16xi32>
    %243 = vector.shape_cast %242 : vector<1x16xi32> to vector<1x1x16xi32>
    %cst_63 = arith.constant dense<2147483647> : vector<1xi32>
    %244 = vector.multi_reduction <minsi>, %243, %cst_63 [1, 2] : vector<1x1x16xi32> to vector<1xi32>
    %245 = vector.shape_cast %244 : vector<1xi32> to vector<1x1x1xi32>
    %246 = vector.extract %245[0, 0, 0] : i32 from vector<1x1x1xi32>
    %c15_i32_64 = arith.constant 15 : i32
    %247 = arith.andi %246, %c15_i32_64 : i32
    %248 = vector.broadcast %c9_i32 : i32 to vector<1x16xi32>
    %249 = arith.cmpi eq, %16, %248 : vector<1x16xi32>
    %250 = vector.broadcast %246 : i32 to vector<1x16xi32>
    %251 = arith.select %249, %250, %227 : vector<1x16xi1>, vector<1x16xi32>
    %252 = arith.index_cast %247 : i32 to index
    %c0_65 = arith.constant 0 : index
    %253 = vector.load %arg3[%252, %c0_65] : memref<16x16xf32, #tpu.memory_space<vmem>>, vector<1x16xf32>
    %254 = vector.broadcast %247 : i32 to vector<1x16xi32>
    %255 = arith.cmpi eq, %16, %254 : vector<1x16xi32>
    %256 = math.absf %238 : vector<1x16xf32>
    %cst_66 = arith.constant 0x7F800000 : f32
    %257 = vector.broadcast %cst_66 : f32 to vector<1x16xf32>
    %258 = arith.cmpf oeq, %256, %257 : vector<1x16xf32>
    %259 = arith.ori %255, %258 : vector<1x16xi1>
    %260 = arith.minimumf %238, %253 : vector<1x16xf32>
    %cst_67 = arith.constant 0x7F800000 : f32
    %261 = vector.broadcast %cst_67 : f32 to vector<1x16xf32>
    %262 = arith.select %259, %261, %260 : vector<1x16xi1>, vector<1x16xf32>
    %c10_i32 = arith.constant 10 : i32
    %263 = tpu.bitcast %262 : vector<1x16xf32> -> vector<1x16xi32>
    %c-16_i32_68 = arith.constant -16 : i32
    %264 = vector.broadcast %c-16_i32_68 : i32 to vector<1x16xi32>
    %265 = arith.andi %263, %264 : vector<1x16xi32>
    %266 = arith.ori %265, %16 : vector<1x16xi32>
    %267 = vector.shape_cast %266 : vector<1x16xi32> to vector<1x1x16xi32>
    %cst_69 = arith.constant dense<2147483647> : vector<1xi32>
    %268 = vector.multi_reduction <minsi>, %267, %cst_69 [1, 2] : vector<1x1x16xi32> to vector<1xi32>
    %269 = vector.shape_cast %268 : vector<1xi32> to vector<1x1x1xi32>
    %270 = vector.extract %269[0, 0, 0] : i32 from vector<1x1x1xi32>
    %c15_i32_70 = arith.constant 15 : i32
    %271 = arith.andi %270, %c15_i32_70 : i32
    %272 = vector.broadcast %c10_i32 : i32 to vector<1x16xi32>
    %273 = arith.cmpi eq, %16, %272 : vector<1x16xi32>
    %274 = vector.broadcast %270 : i32 to vector<1x16xi32>
    %275 = arith.select %273, %274, %251 : vector<1x16xi1>, vector<1x16xi32>
    %276 = arith.index_cast %271 : i32 to index
    %c0_71 = arith.constant 0 : index
    %277 = vector.load %arg3[%276, %c0_71] : memref<16x16xf32, #tpu.memory_space<vmem>>, vector<1x16xf32>
    %278 = vector.broadcast %271 : i32 to vector<1x16xi32>
    %279 = arith.cmpi eq, %16, %278 : vector<1x16xi32>
    %280 = math.absf %262 : vector<1x16xf32>
    %cst_72 = arith.constant 0x7F800000 : f32
    %281 = vector.broadcast %cst_72 : f32 to vector<1x16xf32>
    %282 = arith.cmpf oeq, %280, %281 : vector<1x16xf32>
    %283 = arith.ori %279, %282 : vector<1x16xi1>
    %284 = arith.minimumf %262, %277 : vector<1x16xf32>
    %cst_73 = arith.constant 0x7F800000 : f32
    %285 = vector.broadcast %cst_73 : f32 to vector<1x16xf32>
    %286 = arith.select %283, %285, %284 : vector<1x16xi1>, vector<1x16xf32>
    %c11_i32 = arith.constant 11 : i32
    %287 = tpu.bitcast %286 : vector<1x16xf32> -> vector<1x16xi32>
    %c-16_i32_74 = arith.constant -16 : i32
    %288 = vector.broadcast %c-16_i32_74 : i32 to vector<1x16xi32>
    %289 = arith.andi %287, %288 : vector<1x16xi32>
    %290 = arith.ori %289, %16 : vector<1x16xi32>
    %291 = vector.shape_cast %290 : vector<1x16xi32> to vector<1x1x16xi32>
    %cst_75 = arith.constant dense<2147483647> : vector<1xi32>
    %292 = vector.multi_reduction <minsi>, %291, %cst_75 [1, 2] : vector<1x1x16xi32> to vector<1xi32>
    %293 = vector.shape_cast %292 : vector<1xi32> to vector<1x1x1xi32>
    %294 = vector.extract %293[0, 0, 0] : i32 from vector<1x1x1xi32>
    %c15_i32_76 = arith.constant 15 : i32
    %295 = arith.andi %294, %c15_i32_76 : i32
    %296 = vector.broadcast %c11_i32 : i32 to vector<1x16xi32>
    %297 = arith.cmpi eq, %16, %296 : vector<1x16xi32>
    %298 = vector.broadcast %294 : i32 to vector<1x16xi32>
    %299 = arith.select %297, %298, %275 : vector<1x16xi1>, vector<1x16xi32>
    %300 = arith.index_cast %295 : i32 to index
    %c0_77 = arith.constant 0 : index
    %301 = vector.load %arg3[%300, %c0_77] : memref<16x16xf32, #tpu.memory_space<vmem>>, vector<1x16xf32>
    %302 = vector.broadcast %295 : i32 to vector<1x16xi32>
    %303 = arith.cmpi eq, %16, %302 : vector<1x16xi32>
    %304 = math.absf %286 : vector<1x16xf32>
    %cst_78 = arith.constant 0x7F800000 : f32
    %305 = vector.broadcast %cst_78 : f32 to vector<1x16xf32>
    %306 = arith.cmpf oeq, %304, %305 : vector<1x16xf32>
    %307 = arith.ori %303, %306 : vector<1x16xi1>
    %308 = arith.minimumf %286, %301 : vector<1x16xf32>
    %cst_79 = arith.constant 0x7F800000 : f32
    %309 = vector.broadcast %cst_79 : f32 to vector<1x16xf32>
    %310 = arith.select %307, %309, %308 : vector<1x16xi1>, vector<1x16xf32>
    %c12_i32 = arith.constant 12 : i32
    %311 = tpu.bitcast %310 : vector<1x16xf32> -> vector<1x16xi32>
    %c-16_i32_80 = arith.constant -16 : i32
    %312 = vector.broadcast %c-16_i32_80 : i32 to vector<1x16xi32>
    %313 = arith.andi %311, %312 : vector<1x16xi32>
    %314 = arith.ori %313, %16 : vector<1x16xi32>
    %315 = vector.shape_cast %314 : vector<1x16xi32> to vector<1x1x16xi32>
    %cst_81 = arith.constant dense<2147483647> : vector<1xi32>
    %316 = vector.multi_reduction <minsi>, %315, %cst_81 [1, 2] : vector<1x1x16xi32> to vector<1xi32>
    %317 = vector.shape_cast %316 : vector<1xi32> to vector<1x1x1xi32>
    %318 = vector.extract %317[0, 0, 0] : i32 from vector<1x1x1xi32>
    %c15_i32_82 = arith.constant 15 : i32
    %319 = arith.andi %318, %c15_i32_82 : i32
    %320 = vector.broadcast %c12_i32 : i32 to vector<1x16xi32>
    %321 = arith.cmpi eq, %16, %320 : vector<1x16xi32>
    %322 = vector.broadcast %318 : i32 to vector<1x16xi32>
    %323 = arith.select %321, %322, %299 : vector<1x16xi1>, vector<1x16xi32>
    %324 = arith.index_cast %319 : i32 to index
    %c0_83 = arith.constant 0 : index
    %325 = vector.load %arg3[%324, %c0_83] : memref<16x16xf32, #tpu.memory_space<vmem>>, vector<1x16xf32>
    %326 = vector.broadcast %319 : i32 to vector<1x16xi32>
    %327 = arith.cmpi eq, %16, %326 : vector<1x16xi32>
    %328 = math.absf %310 : vector<1x16xf32>
    %cst_84 = arith.constant 0x7F800000 : f32
    %329 = vector.broadcast %cst_84 : f32 to vector<1x16xf32>
    %330 = arith.cmpf oeq, %328, %329 : vector<1x16xf32>
    %331 = arith.ori %327, %330 : vector<1x16xi1>
    %332 = arith.minimumf %310, %325 : vector<1x16xf32>
    %cst_85 = arith.constant 0x7F800000 : f32
    %333 = vector.broadcast %cst_85 : f32 to vector<1x16xf32>
    %334 = arith.select %331, %333, %332 : vector<1x16xi1>, vector<1x16xf32>
    %c13_i32 = arith.constant 13 : i32
    %335 = tpu.bitcast %334 : vector<1x16xf32> -> vector<1x16xi32>
    %c-16_i32_86 = arith.constant -16 : i32
    %336 = vector.broadcast %c-16_i32_86 : i32 to vector<1x16xi32>
    %337 = arith.andi %335, %336 : vector<1x16xi32>
    %338 = arith.ori %337, %16 : vector<1x16xi32>
    %339 = vector.shape_cast %338 : vector<1x16xi32> to vector<1x1x16xi32>
    %cst_87 = arith.constant dense<2147483647> : vector<1xi32>
    %340 = vector.multi_reduction <minsi>, %339, %cst_87 [1, 2] : vector<1x1x16xi32> to vector<1xi32>
    %341 = vector.shape_cast %340 : vector<1xi32> to vector<1x1x1xi32>
    %342 = vector.extract %341[0, 0, 0] : i32 from vector<1x1x1xi32>
    %c15_i32_88 = arith.constant 15 : i32
    %343 = arith.andi %342, %c15_i32_88 : i32
    %344 = vector.broadcast %c13_i32 : i32 to vector<1x16xi32>
    %345 = arith.cmpi eq, %16, %344 : vector<1x16xi32>
    %346 = vector.broadcast %342 : i32 to vector<1x16xi32>
    %347 = arith.select %345, %346, %323 : vector<1x16xi1>, vector<1x16xi32>
    %348 = arith.index_cast %343 : i32 to index
    %c0_89 = arith.constant 0 : index
    %349 = vector.load %arg3[%348, %c0_89] : memref<16x16xf32, #tpu.memory_space<vmem>>, vector<1x16xf32>
    %350 = vector.broadcast %343 : i32 to vector<1x16xi32>
    %351 = arith.cmpi eq, %16, %350 : vector<1x16xi32>
    %352 = math.absf %334 : vector<1x16xf32>
    %cst_90 = arith.constant 0x7F800000 : f32
    %353 = vector.broadcast %cst_90 : f32 to vector<1x16xf32>
    %354 = arith.cmpf oeq, %352, %353 : vector<1x16xf32>
    %355 = arith.ori %351, %354 : vector<1x16xi1>
    %356 = arith.minimumf %334, %349 : vector<1x16xf32>
    %cst_91 = arith.constant 0x7F800000 : f32
    %357 = vector.broadcast %cst_91 : f32 to vector<1x16xf32>
    %358 = arith.select %355, %357, %356 : vector<1x16xi1>, vector<1x16xf32>
    %c14_i32 = arith.constant 14 : i32
    %359 = tpu.bitcast %358 : vector<1x16xf32> -> vector<1x16xi32>
    %c-16_i32_92 = arith.constant -16 : i32
    %360 = vector.broadcast %c-16_i32_92 : i32 to vector<1x16xi32>
    %361 = arith.andi %359, %360 : vector<1x16xi32>
    %362 = arith.ori %361, %16 : vector<1x16xi32>
    %363 = vector.shape_cast %362 : vector<1x16xi32> to vector<1x1x16xi32>
    %cst_93 = arith.constant dense<2147483647> : vector<1xi32>
    %364 = vector.multi_reduction <minsi>, %363, %cst_93 [1, 2] : vector<1x1x16xi32> to vector<1xi32>
    %365 = vector.shape_cast %364 : vector<1xi32> to vector<1x1x1xi32>
    %366 = vector.extract %365[0, 0, 0] : i32 from vector<1x1x1xi32>
    %c15_i32_94 = arith.constant 15 : i32
    %367 = arith.andi %366, %c15_i32_94 : i32
    %368 = vector.broadcast %c14_i32 : i32 to vector<1x16xi32>
    %369 = arith.cmpi eq, %16, %368 : vector<1x16xi32>
    %370 = vector.broadcast %366 : i32 to vector<1x16xi32>
    %371 = arith.select %369, %370, %347 : vector<1x16xi1>, vector<1x16xi32>
    %372 = arith.index_cast %367 : i32 to index
    %c0_95 = arith.constant 0 : index
    %373 = vector.load %arg3[%372, %c0_95] : memref<16x16xf32, #tpu.memory_space<vmem>>, vector<1x16xf32>
    %374 = vector.broadcast %367 : i32 to vector<1x16xi32>
    %375 = arith.cmpi eq, %16, %374 : vector<1x16xi32>
    %376 = math.absf %358 : vector<1x16xf32>
    %cst_96 = arith.constant 0x7F800000 : f32
    %377 = vector.broadcast %cst_96 : f32 to vector<1x16xf32>
    %378 = arith.cmpf oeq, %376, %377 : vector<1x16xf32>
    %379 = arith.ori %375, %378 : vector<1x16xi1>
    %380 = arith.minimumf %358, %373 : vector<1x16xf32>
    %cst_97 = arith.constant 0x7F800000 : f32
    %381 = vector.broadcast %cst_97 : f32 to vector<1x16xf32>
    %382 = arith.select %379, %381, %380 : vector<1x16xi1>, vector<1x16xf32>
    %c15_i32_98 = arith.constant 15 : i32
    %c-16_i32_99 = arith.constant -16 : i32
    %383 = vector.broadcast %c-16_i32_99 : i32 to vector<1x16xi32>
    %384 = arith.andi %371, %383 : vector<1x16xi32>
    %385 = tpu.bitcast %384 : vector<1x16xi32> -> vector<1x16xf32>
    %c15_i32_100 = arith.constant 15 : i32
    %386 = vector.broadcast %c15_i32_100 : i32 to vector<1x16xi32>
    %387 = arith.cmpi slt, %16, %386 : vector<1x16xi32>
    %388 = math.sqrt %385 : vector<1x16xf32>
    %389 = arith.mulf %388, %388 : vector<1x16xf32>
    %390 = arith.mulf %388, %389 : vector<1x16xf32>
    %cst_101 = arith.constant 5.000000e-01 : f32
    %391 = vector.broadcast %cst_101 : f32 to vector<1x16xf32>
    %392 = arith.mulf %391, %390 : vector<1x16xf32>
    %cst_102 = arith.constant 0.000000e+00 : f32
    %393 = vector.broadcast %cst_102 : f32 to vector<1x16xf32>
    %394 = arith.select %387, %392, %393 : vector<1x16xi1>, vector<1x16xf32>
    %395 = vector.shape_cast %394 : vector<1x16xf32> to vector<1x1x16xf32>
    %cst_103 = arith.constant dense<0.000000e+00> : vector<1xf32>
    %396 = vector.multi_reduction <add>, %395, %cst_103 [1, 2] : vector<1x1x16xf32> to vector<1xf32>
    %397 = vector.shape_cast %396 : vector<1xf32> to vector<1x1x1xf32>
    %398 = vector.extract %397[0, 0, 0] : f32 from vector<1x1x1xf32>
    %399 = vector.broadcast %398 : f32 to vector<1x1x128xf32>
    %c0_104 = arith.constant 0 : index
    %c0_105 = arith.constant 0 : index
    %c0_106 = arith.constant 0 : index
    %400 = vector.load %arg2[%c0_104, %c0_105, %c0_106] : memref<1x1x128xf32, #tpu.memory_space<vmem>>, vector<1x1x128xf32>
    tpu.vector_store %arg2[%c0_104, %c0_105, %c0_106], %399 {strides = array<i32>} : memref<1x1x128xf32, #tpu.memory_space<vmem>>, vector<1x1x128xf32>,
    return
  }
  func.func @transform_0(%arg0: i32) -> (i32, i32, i32) {
    %c0_i32 = arith.constant 0 : i32
    %c0_i32_0 = arith.constant 0 : i32
    %c0_i32_1 = arith.constant 0 : i32
    return %arg0, %c0_i32, %c0_i32_0 : i32, i32, i32
  }
  func.func @transform_1(%arg0: i32) -> (i32, i32, i32) {
    %c0_i32 = arith.constant 0 : i32
    %c0_i32_0 = arith.constant 0 : i32
    %c0_i32_1 = arith.constant 0 : i32
    return %arg0, %c0_i32, %c0_i32_0 : i32, i32, i32
  }
}

</mosaic_0001>

<llo_original>
// kernel: tpu_custom_call.1
$region0: #{tpu_custom_call.1}
  #allocation0 [shape = 'u32[]', space=smem, size = 0x4, offset = 0x4, fixed_abs, tag = 'smem constant byte address 0x4 - core index']
  #allocation1 [shape = 'u32[144,128]{1,0:T(1,128)}', space=vmem, size = 0x12000, scoped, tag = 'internal scratch']
  #allocation2 [shape = 'f32[16,16]{1,0:T(8,128)}', space=vmem, size = 0x2000, scoped, tag = 'scratch operand']
  %s0 = inlined_call_operand.vmem [shape: f32[1,16,8], index: 0, kind: input, shape index: {}]
  %s1 = inlined_call_operand.hbm [shape: f32[1,1,128], index: 1, kind: output, shape index: {}]
  %s2 = sld [smem:[#allocation0]]
  $region14: #{tpu_custom_call.1} parent=0
    _
  %s4 = ssub.s32 1, %s2
  %s5 = scalar_select 0, %s4, %s2
  $region1: #{tpu_custom_call.1} parent=0
    #allocation3 [shape = 'u8[512]{0}', space=vmem, size = 0x400, scoped, tag = 'output window, operand 0, single buffered']
    #allocation4 [shape = 's32[1]{0}', space=sflag, size = 0x4, scoped, tag = 'scoped memory for tpu_custom_call.1']
    %6 = vsyncpa [#allocation4], 0
    // Predicated region
    $region2: #{tpu_custom_call.1} parent=1 // pred_check
      _
    $region3: #{tpu_custom_call.1} parent=1 // pred_check_branch
      %8 = sbr.rel (0) target = $region5
    $region4: #{tpu_custom_call.1} parent=1 // pred_region
      _
    $region5: #{tpu_custom_call.1} parent=1 // pred_fallthru
      _
    %v9 = vld [vmem:[%s0] sm:$0xff]
    %v10 = vld [vmem:[%s0 + $0x8] sm:$0xff]
    %vm11 = vcmask 64512
    %v13 = vsel %vm11, %v9, 0
    %v16 = vsel %vm11, %v10, 0
    %18 = vmatprep.subr.mxu0 0.0
    %19 = vmatpush1.xpose.msra.mxu0 0.0
    %20 = vmatprep.subr.mxu0 0.0
    %21 = vmatpush1.xpose.msra.mxu0 0.0
    %22 = vmatprep.subr.mxu0 0.0
    %23 = vmatpush1.xpose.msra.mxu0 0.0
    %24 = vmatprep.subr.mxu0 0.0
    %25 = vmatpush1.xpose.msra.mxu0 0.0
    %26 = vmatprep.subr.mxu0 0.0
    %27 = vmatpush1.xpose.msra.mxu0 0.0
    %28 = vmatprep.subr.mxu0 0.0
    %29 = vmatpush1.xpose.msra.mxu0 0.0
    %30 = vmatprep.subr.mxu0 0.0
    %31 = vmatpush1.xpose.msra.mxu0 0.0
    %32 = vmatprep.subr.mxu0 0.0
    %33 = vmatpush1.xpose.msra.mxu0 0.0
    %34 = vmatprep.subr.mxu0 0.0
    %35 = vmatpush1.xpose.msra.mxu0 0.0
    %36 = vmatprep.subr.mxu0 0.0
    %37 = vmatpush1.xpose.msra.mxu0 0.0
    %38 = vmatprep.subr.mxu0 0.0
    %39 = vmatpush1.xpose.msra.mxu0 0.0
    %40 = vmatprep.subr.mxu0 0.0
    %41 = vmatpush1.xpose.msra.mxu0 0.0
    %42 = vmatprep.subr.mxu0 0.0
    %43 = vmatpush1.xpose.msra.mxu0 0.0
    %44 = vmatprep.subr.mxu0 0.0
    %45 = vmatpush1.xpose.msra.mxu0 0.0
    %46 = vmatprep.subr.mxu0 0.0
    %47 = vmatpush1.xpose.msra.mxu0 %v16
    %48 = vmatprep.subr.mxu0 0.0
    %49 = vmatpush1.xpose.msra.mxu0 %v13
    %50 = vmatprep.subr.mxu0 0.0
    %51 = vmatpush2.xpose.msra.mxu0 0.0
    %52 = vmatprep.subr.mxu0 0.0
    %53 = vmatpush2.xpose.msra.mxu0 0.0
    %54 = vmatprep.subr.mxu0 0.0
    %55 = vmatpush2.xpose.msra.mxu0 0.0
    %56 = vmatprep.subr.mxu0 0.0
    %57 = vmatpush2.xpose.msra.mxu0 0.0
    %58 = vmatprep.subr.mxu0 0.0
    %59 = vmatpush2.xpose.msra.mxu0 0.0
    %60 = vmatprep.subr.mxu0 0.0
    %61 = vmatpush2.xpose.msra.mxu0 0.0
    %62 = vmatprep.subr.mxu0 0.0
    %63 = vmatpush2.xpose.msra.mxu0 0.0
    %64 = vmatprep.subr.mxu0 0.0
    %65 = vmatpush2.xpose.msra.mxu0 0.0
    %66 = vmatprep.subr.mxu0 0.0
    %67 = vmatpush2.xpose.msra.mxu0 0.0
    %68 = vmatprep.subr.mxu0 0.0
    %69 = vmatpush2.xpose.msra.mxu0 0.0
    %70 = vmatprep.subr.mxu0 0.0
    %71 = vmatpush2.xpose.msra.mxu0 0.0
    %72 = vmatprep.subr.mxu0 0.0
    %73 = vmatpush2.xpose.msra.mxu0 0.0
    %74 = vmatprep.subr.mxu0 0.0
    %75 = vmatpush2.xpose.msra.mxu0 0.0
    %76 = vmatprep.subr.mxu0 0.0
    %77 = vmatpush2.xpose.msra.mxu0 0.0
    %78 = vmatprep.subr.mxu0 0.0
    %79 = vmatpush2.xpose.msra.mxu0 0.0
    %80 = vmatprep.subr.mxu0 0.0
    %81 = vmatpush2.xpose.msra.mxu0 0.0
    %82 = vmatprep.mubr.f32.mxu0 0.0
    %83 = vmatmul.mubr.f32.gmra.mxu0 %v13
    %v84 = vpop.f32.mrf.mxu0
    %v85 = vadd.f32 0.0, %v84
    %v86 = vpop.f32.mrf.mxu0
    %87 = vmatprep.mubr.f32.mxu0 0.0
    %88 = vmatmul.mubr.f32.gmra.mxu0 %v16
    %v89 = vpop.f32.mrf.mxu0
    %v90 = vadd.f32 0.0, %v89
    %v91 = vpop.f32.mrf.mxu0
    %92 = vdwg.mxu0
    %v93 = vmul.f32 %v9, %v9
    %v94 = vmul.f32 %v10, %v10
    %v95 = vsel %vm11, %v93, 0.0
    %96 = vadd.xlane.f32.xlu0 %v95
    %v97 = vpop.xlane.xlu0 %96
    %v98 = vsel %vm11, %v94, 0.0
    %99 = vadd.xlane.f32.xlu0 %v98
    %v100 = vpop.xlane.xlu0 %99
    %101 = vxpose.xlu0.b32.start [1/16] %v97, 128
    %102 = vxpose.xlu0.b32.cont [2/16] %v100, 128
    %103 = vxpose.xlu0.b32.cont [3/16] 0.0, 128
    %104 = vxpose.xlu0.b32.cont [4/16] 0.0, 128
    %105 = vxpose.xlu0.b32.cont [5/16] 0.0, 128
    %106 = vxpose.xlu0.b32.cont [6/16] 0.0, 128
    %107 = vxpose.xlu0.b32.cont [7/16] 0.0, 128
    %108 = vxpose.xlu0.b32.cont [8/16] 0.0, 128
    %109 = vxpose.xlu0.b32.cont [9/16] 0.0, 128
    %110 = vxpose.xlu0.b32.cont [10/16] 0.0, 128
    %111 = vxpose.xlu0.b32.cont [11/16] 0.0, 128
    %112 = vxpose.xlu0.b32.cont [12/16] 0.0, 128
    %113 = vxpose.xlu0.b32.cont [13/16] 0.0, 128
    %114 = vxpose.xlu0.b32.cont [14/16] 0.0, 128
    %115 = vxpose.xlu0.b32.cont [15/16] 0.0, 128
    %116 = vxpose.xlu0.b32.end [16/16] 0.0, 128
    %v117 = vpop.trf.xlu0
    %v118 = vpop.trf.xlu0
    %v119 = vpop.trf.xlu0
    %v120 = vpop.trf.xlu0
    %v121 = vpop.trf.xlu0
    %v122 = vpop.trf.xlu0
    %v123 = vpop.trf.xlu0
    %v124 = vpop.trf.xlu0
    %v125 = vpop.trf.xlu0
    %v126 = vpop.trf.xlu0
    %v127 = vpop.trf.xlu0
    %v128 = vpop.trf.xlu0
    %v129 = vpop.trf.xlu0
    %v130 = vpop.trf.xlu0
    %v131 = vpop.trf.xlu0
    %v132 = vpop.trf.xlu0
    %v133 = vlaneseq
    %v134 = vshrl.u32 %v133, 7
    %v135 = vsub.s32 0, %v134
    %v136 = vrot.slane %v117, %v135
    %v137 = vadd.f32 %v97, %v136
    %v138 = vadd.f32 %v100, %v136
    %v139 = vmul.f32 %v85, 2.0
    %v140 = vmul.f32 %v90, 2.0
    %v141 = vsub.f32 %v137, %v139
    %v142 = vsub.f32 %v138, %v140
    %v143 = vmax.f32 %v141, 0.0
    %v144 = vmax.f32 %v142, 0.0
    %vm145 = vcmask 130048
    %146 = vst.msk [vmem:[#allocation2] sm:$0xff] %vm145, %v143
    %147 = vst.msk [vmem:[#allocation2 + $0x8] sm:$0xff] %vm145, %v144
    %v148 = vlaneseq
    %v149 = vand.u32 %v148, 127
    %vm150 = vcmp.eq.s32.totalorder %v149, 0
    %v151 = vsel %vm150, inf, %v143
    %v153 = vand.u32 %v151, 4294967280
    %v154 = vor.u32 %v153, %v149
    %vm155 = vcmask 122880
    %v156 = vsel %vm155, %v154, 2147483647
    %v157 = vand.u32 %v156, 65535
    %v158 = vshra.s32 %v156, 16
    %v159 = vcvt.s32.f32 %v157
    %v160 = vcvt.s32.f32 %v158
    %161 = vmin.xlane.f32.xlu0 %v160
    %v162 = vpop.xlane.xlu0 %161
    %vm163 = vcmp.eq.f32.partialorder %v160, %v162
    %v164 = vsel %vm163, %v159, inf
    %165 = vmin.xlane.f32.xlu0 %v164
    %v166 = vpop.xlane.xlu0 %165
    %v167 = vcvt.f32.s32 %v166
    %v168 = vcvt.f32.s32 %v162
    %v169 = vshll.u32 %v168, 16
    %v170 = vadd.s32 %v169, %v167
    %v171 = vrot.slane %v170, 4
    %vm172 = vcmp.lt.s32.totalorder %v170, %v171
    %v173 = vsel %vm172, %v170, %v171
    %v174 = vrot.slane %v173, 2
    %vm175 = vcmp.lt.s32.totalorder %v173, %v174
    %v176 = vsel %vm175, %v173, %v174
    %v177 = vrot.slane %v176, 1
    %vm178 = vcmp.lt.s32.totalorder %v176, %v177
    %v179 = vsel %vm178, %v176, %v177
    %s180 = vtos %v179
    %s181 = sand.u32 %s180, 15
    %v182 = vstv %s180
    %v183 = vsel %vm150, %v182, 0
    %s184 = scalar_lea.vmem [#allocation2], %s181
    %v185 = vld [vmem:[%s184] sm:$0x1]
    %v186 = vstv %s181
    %vm187 = vcmp.eq.s32.totalorder %v149, %v186
    %v188 = vand.u32 2147483647, %v151
    %vm189 = vcmp.eq.f32.partialorder %v188, inf
    %vm190 = vmor %vm187, %vm189
    %v191 = vmin.f32 %v151, %v185
    %v192 = vsel %vm190, inf, %v191
    %v194 = vand.u32 %v192, 4294967280
    %v195 = vor.u32 %v194, %v149
    %v196 = vsel %vm155, %v195, 2147483647
    %v197 = vand.u32 %v196, 65535
    %v198 = vshra.s32 %v196, 16
    %v199 = vcvt.s32.f32 %v197
    %v200 = vcvt.s32.f32 %v198
    %201 = vmin.xlane.f32.xlu0 %v200
    %v202 = vpop.xlane.xlu0 %201
    %vm203 = vcmp.eq.f32.partialorder %v200, %v202
    %v204 = vsel %vm203, %v199, inf
    %205 = vmin.xlane.f32.xlu0 %v204
    %v206 = vpop.xlane.xlu0 %205
    %v207 = vcvt.f32.s32 %v206
    %v208 = vcvt.f32.s32 %v202
    %v209 = vshll.u32 %v208, 16
    %v210 = vadd.s32 %v209, %v207
    %v211 = vrot.slane %v210, 4
    %vm212 = vcmp.lt.s32.totalorder %v210, %v211
    %v213 = vsel %vm212, %v210, %v211
    %v214 = vrot.slane %v213, 2
    %vm215 = vcmp.lt.s32.totalorder %v213, %v214
    %v216 = vsel %vm215, %v213, %v214
    %v217 = vrot.slane %v216, 1
    %vm218 = vcmp.lt.s32.totalorder %v216, %v217
    %v219 = vsel %vm218, %v216, %v217
    %s220 = vtos %v219
    %s221 = sand.u32 %s220, 15
    %vm222 = vcmp.eq.s32.totalorder %v149, 1
    %v223 = vstv %s220
    %v224 = vsel %vm222, %v223, %v183
    %s225 = scalar_lea.vmem [#allocation2], %s221
    %v226 = vld [vmem:[%s225] sm:$0x1]
    %v227 = vstv %s221
    %vm228 = vcmp.eq.s32.totalorder %v149, %v227
    %v229 = vand.u32 2147483647, %v192
    %vm230 = vcmp.eq.f32.partialorder %v229, inf
    %vm231 = vmor %vm228, %vm230
    %v232 = vmin.f32 %v192, %v226
    %v233 = vsel %vm231, inf, %v232
    %v235 = vand.u32 %v233, 4294967280
    %v236 = vor.u32 %v235, %v149
    %v237 = vsel %vm155, %v236, 2147483647
    %v238 = vand.u32 %v237, 65535
    %v239 = vshra.s32 %v237, 16
    %v240 = vcvt.s32.f32 %v238
    %v241 = vcvt.s32.f32 %v239
    %242 = vmin.xlane.f32.xlu0 %v241
    %v243 = vpop.xlane.xlu0 %242
    %vm244 = vcmp.eq.f32.partialorder %v241, %v243
    %v245 = vsel %vm244, %v240, inf
    %246 = vmin.xlane.f32.xlu0 %v245
    %v247 = vpop.xlane.xlu0 %246
    %v248 = vcvt.f32.s32 %v247
    %v249 = vcvt.f32.s32 %v243
    %v250 = vshll.u32 %v249, 16
    %v251 = vadd.s32 %v250, %v248
    %v252 = vrot.slane %v251, 4
    %vm253 = vcmp.lt.s32.totalorder %v251, %v252
    %v254 = vsel %vm253, %v251, %v252
    %v255 = vrot.slane %v254, 2
    %vm256 = vcmp.lt.s32.totalorder %v254, %v255
    %v257 = vsel %vm256, %v254, %v255
    %v258 = vrot.slane %v257, 1
    %vm259 = vcmp.lt.s32.totalorder %v257, %v258
    %v260 = vsel %vm259, %v257, %v258
    %s261 = vtos %v260
    %s262 = sand.u32 %s261, 15
    %vm263 = vcmp.eq.s32.totalorder %v149, 2
    %v264 = vstv %s261
    %v265 = vsel %vm263, %v264, %v224
    %s266 = scalar_lea.vmem [#allocation2], %s262
    %v267 = vld [vmem:[%s266] sm:$0x1]
    %v268 = vstv %s262
    %vm269 = vcmp.eq.s32.totalorder %v149, %v268
    %v270 = vand.u32 2147483647, %v233
    %vm271 = vcmp.eq.f32.partialorder %v270, inf
    %vm272 = vmor %vm269, %vm271
    %v273 = vmin.f32 %v233, %v267
    %v274 = vsel %vm272, inf, %v273
    %v276 = vand.u32 %v274, 4294967280
    %v277 = vor.u32 %v276, %v149
    %v278 = vsel %vm155, %v277, 2147483647
    %v279 = vand.u32 %v278, 65535
    %v280 = vshra.s32 %v278, 16
    %v281 = vcvt.s32.f32 %v279
    %v282 = vcvt.s32.f32 %v280
    %283 = vmin.xlane.f32.xlu0 %v282
    %v284 = vpop.xlane.xlu0 %283
    %vm285 = vcmp.eq.f32.partialorder %v282, %v284
    %v286 = vsel %vm285, %v281, inf
    %287 = vmin.xlane.f32.xlu0 %v286
    %v288 = vpop.xlane.xlu0 %287
    %v289 = vcvt.f32.s32 %v288
    %v290 = vcvt.f32.s32 %v284
    %v291 = vshll.u32 %v290, 16
    %v292 = vadd.s32 %v291, %v289
    %v293 = vrot.slane %v292, 4
    %vm294 = vcmp.lt.s32.totalorder %v292, %v293
    %v295 = vsel %vm294, %v292, %v293
    %v296 = vrot.slane %v295, 2
    %vm297 = vcmp.lt.s32.totalorder %v295, %v296
    %v298 = vsel %vm297, %v295, %v296
    %v299 = vrot.slane %v298, 1
    %vm300 = vcmp.lt.s32.totalorder %v298, %v299
    %v301 = vsel %vm300, %v298, %v299
    %s302 = vtos %v301
    %s303 = sand.u32 %s302, 15
    %vm304 = vcmp.eq.s32.totalorder %v149, 3
    %v305 = vstv %s302
    %v306 = vsel %vm304, %v305, %v265
    %s307 = scalar_lea.vmem [#allocation2], %s303
    %v308 = vld [vmem:[%s307] sm:$0x1]
    %v309 = vstv %s303
    %vm310 = vcmp.eq.s32.totalorder %v149, %v309
    %v311 = vand.u32 2147483647, %v274
    %vm312 = vcmp.eq.f32.partialorder %v311, inf
    %vm313 = vmor %vm310, %vm312
    %v314 = vmin.f32 %v274, %v308
    %v315 = vsel %vm313, inf, %v314
    %v317 = vand.u32 %v315, 4294967280
    %v318 = vor.u32 %v317, %v149
    %v319 = vsel %vm155, %v318, 2147483647
    %v320 = vand.u32 %v319, 65535
    %v321 = vshra.s32 %v319, 16
    %v322 = vcvt.s32.f32 %v320
    %v323 = vcvt.s32.f32 %v321
    %324 = vmin.xlane.f32.xlu0 %v323
    %v325 = vpop.xlane.xlu0 %324
    %vm326 = vcmp.eq.f32.partialorder %v323, %v325
    %v327 = vsel %vm326, %v322, inf
    %328 = vmin.xlane.f32.xlu0 %v327
    %v329 = vpop.xlane.xlu0 %328
    %v330 = vcvt.f32.s32 %v329
    %v331 = vcvt.f32.s32 %v325
    %v332 = vshll.u32 %v331, 16
    %v333 = vadd.s32 %v332, %v330
    %v334 = vrot.slane %v333, 4
    %vm335 = vcmp.lt.s32.totalorder %v333, %v334
    %v336 = vsel %vm335, %v333, %v334
    %v337 = vrot.slane %v336, 2
    %vm338 = vcmp.lt.s32.totalorder %v336, %v337
    %v339 = vsel %vm338, %v336, %v337
    %v340 = vrot.slane %v339, 1
    %vm341 = vcmp.lt.s32.totalorder %v339, %v340
    %v342 = vsel %vm341, %v339, %v340
    %s343 = vtos %v342
    %s344 = sand.u32 %s343, 15
    %vm345 = vcmp.eq.s32.totalorder %v149, 4
    %v346 = vstv %s343
    %v347 = vsel %vm345, %v346, %v306
    %s348 = scalar_lea.vmem [#allocation2], %s344
    %v349 = vld [vmem:[%s348] sm:$0x1]
    %v350 = vstv %s344
    %vm351 = vcmp.eq.s32.totalorder %v149, %v350
    %v352 = vand.u32 2147483647, %v315
    %vm353 = vcmp.eq.f32.partialorder %v352, inf
    %vm354 = vmor %vm351, %vm353
    %v355 = vmin.f32 %v315, %v349
    %v356 = vsel %vm354, inf, %v355
    %v358 = vand.u32 %v356, 4294967280
    %v359 = vor.u32 %v358, %v149
    %v360 = vsel %vm155, %v359, 2147483647
    %v361 = vand.u32 %v360, 65535
    %v362 = vshra.s32 %v360, 16
    %v363 = vcvt.s32.f32 %v361
    %v364 = vcvt.s32.f32 %v362
    %365 = vmin.xlane.f32.xlu0 %v364
    %v366 = vpop.xlane.xlu0 %365
    %vm367 = vcmp.eq.f32.partialorder %v364, %v366
    %v368 = vsel %vm367, %v363, inf
    %369 = vmin.xlane.f32.xlu0 %v368
    %v370 = vpop.xlane.xlu0 %369
    %v371 = vcvt.f32.s32 %v370
    %v372 = vcvt.f32.s32 %v366
    %v373 = vshll.u32 %v372, 16
    %v374 = vadd.s32 %v373, %v371
    %v375 = vrot.slane %v374, 4
    %vm376 = vcmp.lt.s32.totalorder %v374, %v375
    %v377 = vsel %vm376, %v374, %v375
    %v378 = vrot.slane %v377, 2
    %vm379 = vcmp.lt.s32.totalorder %v377, %v378
    %v380 = vsel %vm379, %v377, %v378
    %v381 = vrot.slane %v380, 1
    %vm382 = vcmp.lt.s32.totalorder %v380, %v381
    %v383 = vsel %vm382, %v380, %v381
    %s384 = vtos %v383
    %s385 = sand.u32 %s384, 15
    %vm386 = vcmp.eq.s32.totalorder %v149, 5
    %v387 = vstv %s384
    %v388 = vsel %vm386, %v387, %v347
    %s389 = scalar_lea.vmem [#allocation2], %s385
    %v390 = vld [vmem:[%s389] sm:$0x1]
    %v391 = vstv %s385
    %vm392 = vcmp.eq.s32.totalorder %v149, %v391
    %v393 = vand.u32 2147483647, %v356
    %vm394 = vcmp.eq.f32.partialorder %v393, inf
    %vm395 = vmor %vm392, %vm394
    %v396 = vmin.f32 %v356, %v390
    %v397 = vsel %vm395, inf, %v396
    %v399 = vand.u32 %v397, 4294967280
    %v400 = vor.u32 %v399, %v149
    %v401 = vsel %vm155, %v400, 2147483647
    %v402 = vand.u32 %v401, 65535
    %v403 = vshra.s32 %v401, 16
    %v404 = vcvt.s32.f32 %v402
    %v405 = vcvt.s32.f32 %v403
    %406 = vmin.xlane.f32.xlu0 %v405
    %v407 = vpop.xlane.xlu0 %406
    %vm408 = vcmp.eq.f32.partialorder %v405, %v407
    %v409 = vsel %vm408, %v404, inf
    %410 = vmin.xlane.f32.xlu0 %v409
    %v411 = vpop.xlane.xlu0 %410
    %v412 = vcvt.f32.s32 %v411
    %v413 = vcvt.f32.s32 %v407
    %v414 = vshll.u32 %v413, 16
    %v415 = vadd.s32 %v414, %v412
    %v416 = vrot.slane %v415, 4
    %vm417 = vcmp.lt.s32.totalorder %v415, %v416
    %v418 = vsel %vm417, %v415, %v416
    %v419 = vrot.slane %v418, 2
    %vm420 = vcmp.lt.s32.totalorder %v418, %v419
    %v421 = vsel %vm420, %v418, %v419
    %v422 = vrot.slane %v421, 1
    %vm423 = vcmp.lt.s32.totalorder %v421, %v422
    %v424 = vsel %vm423, %v421, %v422
    %s425 = vtos %v424
    %s426 = sand.u32 %s425, 15
    %vm427 = vcmp.eq.s32.totalorder %v149, 6
    %v428 = vstv %s425
    %v429 = vsel %vm427, %v428, %v388
    %s430 = scalar_lea.vmem [#allocation2], %s426
    %v431 = vld [vmem:[%s430] sm:$0x1]
    %v432 = vstv %s426
    %vm433 = vcmp.eq.s32.totalorder %v149, %v432
    %v434 = vand.u32 2147483647, %v397
    %vm435 = vcmp.eq.f32.partialorder %v434, inf
    %vm436 = vmor %vm433, %vm435
    %v437 = vmin.f32 %v397, %v431
    %v438 = vsel %vm436, inf, %v437
    %v440 = vand.u32 %v438, 4294967280
    %v441 = vor.u32 %v440, %v149
    %v442 = vsel %vm155, %v441, 2147483647
    %v443 = vand.u32 %v442, 65535
    %v444 = vshra.s32 %v442, 16
    %v445 = vcvt.s32.f32 %v443
    %v446 = vcvt.s32.f32 %v444
    %447 = vmin.xlane.f32.xlu0 %v446
    %v448 = vpop.xlane.xlu0 %447
    %vm449 = vcmp.eq.f32.partialorder %v446, %v448
    %v450 = vsel %vm449, %v445, inf
    %451 = vmin.xlane.f32.xlu0 %v450
    %v452 = vpop.xlane.xlu0 %451
    %v453 = vcvt.f32.s32 %v452
    %v454 = vcvt.f32.s32 %v448
    %v455 = vshll.u32 %v454, 16
    %v456 = vadd.s32 %v455, %v453
    %v457 = vrot.slane %v456, 4
    %vm458 = vcmp.lt.s32.totalorder %v456, %v457
    %v459 = vsel %vm458, %v456, %v457
    %v460 = vrot.slane %v459, 2
    %vm461 = vcmp.lt.s32.totalorder %v459, %v460
    %v462 = vsel %vm461, %v459, %v460
    %v463 = vrot.slane %v462, 1
    %vm464 = vcmp.lt.s32.totalorder %v462, %v463
    %v465 = vsel %vm464, %v462, %v463
    %s466 = vtos %v465
    %s467 = sand.u32 %s466, 15
    %vm468 = vcmp.eq.s32.totalorder %v149, 7
    %v469 = vstv %s466
    %v470 = vsel %vm468, %v469, %v429
    %s471 = scalar_lea.vmem [#allocation2], %s467
    %v472 = vld [vmem:[%s471] sm:$0x1]
    %v473 = vstv %s467
    %vm474 = vcmp.eq.s32.totalorder %v149, %v473
    %v475 = vand.u32 2147483647, %v438
    %vm476 = vcmp.eq.f32.partialorder %v475, inf
    %vm477 = vmor %vm474, %vm476
    %v478 = vmin.f32 %v438, %v472
    %v479 = vsel %vm477, inf, %v478
    %v481 = vand.u32 %v479, 4294967280
    %v482 = vor.u32 %v481, %v149
    %v483 = vsel %vm155, %v482, 2147483647
    %v484 = vand.u32 %v483, 65535
    %v485 = vshra.s32 %v483, 16
    %v486 = vcvt.s32.f32 %v484
    %v487 = vcvt.s32.f32 %v485
    %488 = vmin.xlane.f32.xlu0 %v487
    %v489 = vpop.xlane.xlu0 %488
    %vm490 = vcmp.eq.f32.partialorder %v487, %v489
    %v491 = vsel %vm490, %v486, inf
    %492 = vmin.xlane.f32.xlu0 %v491
    %v493 = vpop.xlane.xlu0 %492
    %v494 = vcvt.f32.s32 %v493
    %v495 = vcvt.f32.s32 %v489
    %v496 = vshll.u32 %v495, 16
    %v497 = vadd.s32 %v496, %v494
    %v498 = vrot.slane %v497, 4
    %vm499 = vcmp.lt.s32.totalorder %v497, %v498
    %v500 = vsel %vm499, %v497, %v498
    %v501 = vrot.slane %v500, 2
    %vm502 = vcmp.lt.s32.totalorder %v500, %v501
    %v503 = vsel %vm502, %v500, %v501
    %v504 = vrot.slane %v503, 1
    %vm505 = vcmp.lt.s32.totalorder %v503, %v504
    %v506 = vsel %vm505, %v503, %v504
    %s507 = vtos %v506
    %s508 = sand.u32 %s507, 15
    %vm509 = vcmp.eq.s32.totalorder %v149, 8
    %v510 = vstv %s507
    %v511 = vsel %vm509, %v510, %v470
    %s512 = scalar_lea.vmem [#allocation2], %s508
    %v513 = vld [vmem:[%s512] sm:$0x1]
    %v514 = vstv %s508
    %vm515 = vcmp.eq.s32.totalorder %v149, %v514
    %v516 = vand.u32 2147483647, %v479
    %vm517 = vcmp.eq.f32.partialorder %v516, inf
    %vm518 = vmor %vm515, %vm517
    %v519 = vmin.f32 %v479, %v513
    %v520 = vsel %vm518, inf, %v519
    %v522 = vand.u32 %v520, 4294967280
    %v523 = vor.u32 %v522, %v149
    %v524 = vsel %vm155, %v523, 2147483647
    %v525 = vand.u32 %v524, 65535
    %v526 = vshra.s32 %v524, 16
    %v527 = vcvt.s32.f32 %v525
    %v528 = vcvt.s32.f32 %v526
    %529 = vmin.xlane.f32.xlu0 %v528
    %v530 = vpop.xlane.xlu0 %529
    %vm531 = vcmp.eq.f32.partialorder %v528, %v530
    %v532 = vsel %vm531, %v527, inf
    %533 = vmin.xlane.f32.xlu0 %v532
    %v534 = vpop.xlane.xlu0 %533
    %v535 = vcvt.f32.s32 %v534
    %v536 = vcvt.f32.s32 %v530
    %v537 = vshll.u32 %v536, 16
    %v538 = vadd.s32 %v537, %v535
    %v539 = vrot.slane %v538, 4
    %vm540 = vcmp.lt.s32.totalorder %v538, %v539
    %v541 = vsel %vm540, %v538, %v539
    %v542 = vrot.slane %v541, 2
    %vm543 = vcmp.lt.s32.totalorder %v541, %v542
    %v544 = vsel %vm543, %v541, %v542
    %v545 = vrot.slane %v544, 1
    %vm546 = vcmp.lt.s32.totalorder %v544, %v545
    %v547 = vsel %vm546, %v544, %v545
    %s548 = vtos %v547
    %s549 = sand.u32 %s548, 15
    %vm550 = vcmp.eq.s32.totalorder %v149, 9
    %v551 = vstv %s548
    %v552 = vsel %vm550, %v551, %v511
    %s553 = scalar_lea.vmem [#allocation2], %s549
    %v554 = vld [vmem:[%s553] sm:$0x1]
    %v555 = vstv %s549
    %vm556 = vcmp.eq.s32.totalorder %v149, %v555
    %v557 = vand.u32 2147483647, %v520
    %vm558 = vcmp.eq.f32.partialorder %v557, inf
    %vm559 = vmor %vm556, %vm558
    %v560 = vmin.f32 %v520, %v554
    %v561 = vsel %vm559, inf, %v560
    %v563 = vand.u32 %v561, 4294967280
    %v564 = vor.u32 %v563, %v149
    %v565 = vsel %vm155, %v564, 2147483647
    %v566 = vand.u32 %v565, 65535
    %v567 = vshra.s32 %v565, 16
    %v568 = vcvt.s32.f32 %v566
    %v569 = vcvt.s32.f32 %v567
    %570 = vmin.xlane.f32.xlu0 %v569
    %v571 = vpop.xlane.xlu0 %570
    %vm572 = vcmp.eq.f32.partialorder %v569, %v571
    %v573 = vsel %vm572, %v568, inf
    %574 = vmin.xlane.f32.xlu0 %v573
    %v575 = vpop.xlane.xlu0 %574
    %v576 = vcvt.f32.s32 %v575
    %v577 = vcvt.f32.s32 %v571
    %v578 = vshll.u32 %v577, 16
    %v579 = vadd.s32 %v578, %v576
    %v580 = vrot.slane %v579, 4
    %vm581 = vcmp.lt.s32.totalorder %v579, %v580
    %v582 = vsel %vm581, %v579, %v580
    %v583 = vrot.slane %v582, 2
    %vm584 = vcmp.lt.s32.totalorder %v582, %v583
    %v585 = vsel %vm584, %v582, %v583
    %v586 = vrot.slane %v585, 1
    %vm587 = vcmp.lt.s32.totalorder %v585, %v586
    %v588 = vsel %vm587, %v585, %v586
    %s589 = vtos %v588
    %s590 = sand.u32 %s589, 15
    %vm591 = vcmp.eq.s32.totalorder %v149, 10
    %v592 = vstv %s589
    %v593 = vsel %vm591, %v592, %v552
    %s594 = scalar_lea.vmem [#allocation2], %s590
    %v595 = vld [vmem:[%s594] sm:$0x1]
    %v596 = vstv %s590
    %vm597 = vcmp.eq.s32.totalorder %v149, %v596
    %v598 = vand.u32 2147483647, %v561
    %vm599 = vcmp.eq.f32.partialorder %v598, inf
    %vm600 = vmor %vm597, %vm599
    %v601 = vmin.f32 %v561, %v595
    %v602 = vsel %vm600, inf, %v601
    %v604 = vand.u32 %v602, 4294967280
    %v605 = vor.u32 %v604, %v149
    %v606 = vsel %vm155, %v605, 2147483647
    %v607 = vand.u32 %v606, 65535
    %v608 = vshra.s32 %v606, 16
    %v609 = vcvt.s32.f32 %v607
    %v610 = vcvt.s32.f32 %v608
    %611 = vmin.xlane.f32.xlu0 %v610
    %v612 = vpop.xlane.xlu0 %611
    %vm613 = vcmp.eq.f32.partialorder %v610, %v612
    %v614 = vsel %vm613, %v609, inf
    %615 = vmin.xlane.f32.xlu0 %v614
    %v616 = vpop.xlane.xlu0 %615
    %v617 = vcvt.f32.s32 %v616
    %v618 = vcvt.f32.s32 %v612
    %v619 = vshll.u32 %v618, 16
    %v620 = vadd.s32 %v619, %v617
    %v621 = vrot.slane %v620, 4
    %vm622 = vcmp.lt.s32.totalorder %v620, %v621
    %v623 = vsel %vm622, %v620, %v621
    %v624 = vrot.slane %v623, 2
    %vm625 = vcmp.lt.s32.totalorder %v623, %v624
    %v626 = vsel %vm625, %v623, %v624
    %v627 = vrot.slane %v626, 1
    %vm628 = vcmp.lt.s32.totalorder %v626, %v627
    %v629 = vsel %vm628, %v626, %v627
    %s630 = vtos %v629
    %s631 = sand.u32 %s630, 15
    %vm632 = vcmp.eq.s32.totalorder %v149, 11
    %v633 = vstv %s630
    %v634 = vsel %vm632, %v633, %v593
    %s635 = scalar_lea.vmem [#allocation2], %s631
    %v636 = vld [vmem:[%s635] sm:$0x1]
    %v637 = vstv %s631
    %vm638 = vcmp.eq.s32.totalorder %v149, %v637
    %v639 = vand.u32 2147483647, %v602
    %vm640 = vcmp.eq.f32.partialorder %v639, inf
    %vm641 = vmor %vm638, %vm640
    %v642 = vmin.f32 %v602, %v636
    %v643 = vsel %vm641, inf, %v642
    %v645 = vand.u32 %v643, 4294967280
    %v646 = vor.u32 %v645, %v149
    %v647 = vsel %vm155, %v646, 2147483647
    %v648 = vand.u32 %v647, 65535
    %v649 = vshra.s32 %v647, 16
    %v650 = vcvt.s32.f32 %v648
    %v651 = vcvt.s32.f32 %v649
    %652 = vmin.xlane.f32.xlu0 %v651
    %v653 = vpop.xlane.xlu0 %652
    %vm654 = vcmp.eq.f32.partialorder %v651, %v653
    %v655 = vsel %vm654, %v650, inf
    %656 = vmin.xlane.f32.xlu0 %v655
    %v657 = vpop.xlane.xlu0 %656
    %v658 = vcvt.f32.s32 %v657
    %v659 = vcvt.f32.s32 %v653
    %v660 = vshll.u32 %v659, 16
    %v661 = vadd.s32 %v660, %v658
    %v662 = vrot.slane %v661, 4
    %vm663 = vcmp.lt.s32.totalorder %v661, %v662
    %v664 = vsel %vm663, %v661, %v662
    %v665 = vrot.slane %v664, 2
    %vm666 = vcmp.lt.s32.totalorder %v664, %v665
    %v667 = vsel %vm666, %v664, %v665
    %v668 = vrot.slane %v667, 1
    %vm669 = vcmp.lt.s32.totalorder %v667, %v668
    %v670 = vsel %vm669, %v667, %v668
    %s671 = vtos %v670
    %s672 = sand.u32 %s671, 15
    %vm673 = vcmp.eq.s32.totalorder %v149, 12
    %v674 = vstv %s671
    %v675 = vsel %vm673, %v674, %v634
    %s676 = scalar_lea.vmem [#allocation2], %s672
    %v677 = vld [vmem:[%s676] sm:$0x1]
    %v678 = vstv %s672
    %vm679 = vcmp.eq.s32.totalorder %v149, %v678
    %v680 = vand.u32 2147483647, %v643
    %vm681 = vcmp.eq.f32.partialorder %v680, inf
    %vm682 = vmor %vm679, %vm681
    %v683 = vmin.f32 %v643, %v677
    %v684 = vsel %vm682, inf, %v683
    %v686 = vand.u32 %v684, 4294967280
    %v687 = vor.u32 %v686, %v149
    %v688 = vsel %vm155, %v687, 2147483647
    %v689 = vand.u32 %v688, 65535
    %v690 = vshra.s32 %v688, 16
    %v691 = vcvt.s32.f32 %v689
    %v692 = vcvt.s32.f32 %v690
    %693 = vmin.xlane.f32.xlu0 %v692
    %v694 = vpop.xlane.xlu0 %693
    %vm695 = vcmp.eq.f32.partialorder %v692, %v694
    %v696 = vsel %vm695, %v691, inf
    %697 = vmin.xlane.f32.xlu0 %v696
    %v698 = vpop.xlane.xlu0 %697
    %v699 = vcvt.f32.s32 %v698
    %v700 = vcvt.f32.s32 %v694
    %v701 = vshll.u32 %v700, 16
    %v702 = vadd.s32 %v701, %v699
    %v703 = vrot.slane %v702, 4
    %vm704 = vcmp.lt.s32.totalorder %v702, %v703
    %v705 = vsel %vm704, %v702, %v703
    %v706 = vrot.slane %v705, 2
    %vm707 = vcmp.lt.s32.totalorder %v705, %v706
    %v708 = vsel %vm707, %v705, %v706
    %v709 = vrot.slane %v708, 1
    %vm710 = vcmp.lt.s32.totalorder %v708, %v709
    %v711 = vsel %vm710, %v708, %v709
    %s712 = vtos %v711
    %s713 = sand.u32 %s712, 15
    %vm714 = vcmp.eq.s32.totalorder %v149, 13
    %v715 = vstv %s712
    %v716 = vsel %vm714, %v715, %v675
    %s717 = scalar_lea.vmem [#allocation2], %s713
    %v718 = vld [vmem:[%s717] sm:$0x1]
    %v719 = vstv %s713
    %vm720 = vcmp.eq.s32.totalorder %v149, %v719
    %v721 = vand.u32 2147483647, %v684
    %vm722 = vcmp.eq.f32.partialorder %v721, inf
    %vm723 = vmor %vm720, %vm722
    %v724 = vmin.f32 %v684, %v718
    %v725 = vsel %vm723, inf, %v724
    %v727 = vand.u32 %v725, 4294967280
    %v728 = vor.u32 %v727, %v149
    %v729 = vsel %vm155, %v728, 2147483647
    %v730 = vand.u32 %v729, 65535
    %v731 = vshra.s32 %v729, 16
    %v732 = vcvt.s32.f32 %v730
    %v733 = vcvt.s32.f32 %v731
    %734 = vmin.xlane.f32.xlu0 %v733
    %v735 = vpop.xlane.xlu0 %734
    %vm736 = vcmp.eq.f32.partialorder %v733, %v735
    %v737 = vsel %vm736, %v732, inf
    %738 = vmin.xlane.f32.xlu0 %v737
    %v739 = vpop.xlane.xlu0 %738
    %v740 = vcvt.f32.s32 %v739
    %v741 = vcvt.f32.s32 %v735
    %v742 = vshll.u32 %v741, 16
    %v743 = vadd.s32 %v742, %v740
    %v744 = vrot.slane %v743, 4
    %vm745 = vcmp.lt.s32.totalorder %v743, %v744
    %v746 = vsel %vm745, %v743, %v744
    %v747 = vrot.slane %v746, 2
    %vm748 = vcmp.lt.s32.totalorder %v746, %v747
    %v749 = vsel %vm748, %v746, %v747
    %v750 = vrot.slane %v749, 1
    %vm751 = vcmp.lt.s32.totalorder %v749, %v750
    %v752 = vsel %vm751, %v749, %v750
    %s753 = vtos %v752
    %vm754 = vcmp.eq.s32.totalorder %v149, 14
    %v755 = vstv %s753
    %v756 = vsel %vm754, %v755, %v716
    %v757 = vand.u32 %v756, 4294967280
    %vm759 = vcmp.lt.s32.totalorder %v149, 15
    %v760 = vrsqrt.pop %v757
    %v761 = vmul.f32 %v757, %v760
    %vm762 = vcmp.eq.f32.partialorder %v757, inf
    %v763 = vsel %vm762, %v757, %v761
    %vm764 = vcmp.eq.f32.partialorder %v757, 0.0
    %v765 = vand.u32 %v757, 2147483648
    %v766 = vsel %vm764, %v765, %v763
    %v767 = vmul.f32 %v766, %v766
    %v768 = vmul.f32 %v766, %v767
    %v769 = vmul.f32 %v768, 0.5
    %v770 = vsel %vm759, %v769, 0.0
    %v771 = vsel %vm155, %v770, 0.0
    %772 = vadd.xlane.f32.xlu0 %v771
    %v773 = vpop.xlane.xlu0 %772
    %v774 = vrot.slane %v773, 4
    %v775 = vadd.f32 %v773, %v774
    %v776 = vrot.slane %v775, 2
    %v777 = vadd.f32 %v775, %v776
    %v778 = vrot.slane %v777, 1
    %v779 = vadd.f32 %v777, %v778
    %s780 = vtos %v779
    %v781 = vstv %s780
    %782 = vst [vmem:[#allocation3] sm:$0x1] %v781
    // Predicated region
    $region6: #{tpu_custom_call.1} parent=1 // pred_check
      _
    $region7: #{tpu_custom_call.1} parent=1 // pred_check_branch
      %784 = sbr.rel (0) target = $region9
    $region8: #{tpu_custom_call.1} parent=1 // pred_region
      %s786 = ssub.s32 16, 16
      %787 = vsyncadd [#allocation4], %s786
      %s789 = sshll.u32 [#allocation3], 4
      %s790 = int_to_ptr.vmem [resolvable:$true] %s789
      %792 = dma.vmem_to_hbm [thread:$0]  %s790, 16, %s1, [#allocation4]
    $region9: #{tpu_custom_call.1} parent=1 // pred_fallthru
      _
    // Predicated region
    $region10: #{tpu_custom_call.1} parent=1 // pred_check
      _
    $region11: #{tpu_custom_call.1} parent=1 // pred_check_branch
      %794 = sbr.rel (0) target = $region13
    $region12: #{tpu_custom_call.1} parent=1 // pred_region
      %795 = dma.done [#allocation4], 16
    $region13: #{tpu_custom_call.1} parent=1 // pred_fallthru
      _
    %796 = vsyncpa [#allocation4], 1

</llo_original>
